<compile_context>
chip_gen: v5e
topology: v5e:2x2
jax: 0.10.0
libtpu: 0.0.40
codegen_flags: <defaults>
</compile_context>

<pallas_src>
import jax
import jax.numpy as jnp
from jax.experimental import pallas as pl
from jax.experimental.pallas import tpu as pltpu


def column_mlp_kernel(x_ref, w1_ref, w2_ref, wh_ref, b_ref, outc_ref, outf_ref):
    C = x_ref.shape[1]
    H = w1_ref.shape[1]
    F = wh_ref.shape[1] - 1

    # f32 bias slab slices (static, lane-aligned starts 0 / H / 2H).
    b1 = b_ref[:, 0:H]                     # [1, H]
    b2 = b_ref[:, H:2 * H]                 # [1, H]
    bh = b_ref[:, 2 * H:2 * H + F + 1]     # [1, F+1]  == [bf | bc]

    x = x_ref[0]                           # [C, inputSize], bf16

    # Hidden MLP stack: bf16 operands on the MXU, f32 accumulation, f32 ReLU
    # (v5e has no bf16 VALU); recast to bf16 only at the next matmul boundary.
    h = jnp.dot(x, w1_ref[...], preferred_element_type=jnp.float32) + b1
    h = jnp.maximum(h, 0.0).astype(jnp.bfloat16)                            # [C, H]
    h = jnp.dot(h, w2_ref[...], preferred_element_type=jnp.float32) + b2
    h = jnp.maximum(h, 0.0).astype(jnp.bfloat16)                            # [C, H]

    # Fused output heads in one lane-wider MXU pass:
    #   head[:, :F] = h_c @ Wf + bf   (per-column feature head)
    #   head[:,  F] = h_c @ Wc + bc   (per-column score)
    head = jnp.dot(h, wh_ref[...], preferred_element_type=jnp.float32) + bh  # [C, F+1]
    head_f = head[:, 0:F]                  # [C, F]
    scores = head[:, F:F + 1]              # [C, 1]

    # Softmax over the column (sublane) axis with an EXACT division so that
    # sum(outC) == 1 to f32 rounding (keeps the folded bf bias term exact).
    m = jnp.max(scores, axis=0, keepdims=True)          # [1, 1]
    e = jnp.exp(scores - m)                              # [C, 1]
    denom = jnp.sum(e, axis=0, keepdims=True)            # [1, 1]
    outc = e / denom                                     # [C, 1]

    # Attention-style pooling fused with the feature head: since bf is already
    # folded into head_f and sum(outC) == 1, this equals inF @ Wf + bf.
    # (At production C*F this becomes a [1,C]@[C,F] MXU matmul after an XLU
    #  transpose of outC; at these shapes the VPU reduce is cheaper.)
    outf = jnp.sum(outc * head_f, axis=0, keepdims=True)  # [1, F]

    outc_ref[0] = outc                     # (1, C, 1) block — no padding lanes
    outf_ref[0] = outf                     # (1, 1, F) block — no padding lanes


def pack_params(params):
    """Pack weights/biases into the kernel's fused layout (done once).

    Weights are stored in bf16 (MXU-native on v5e/v6e/v7x, half the DMA/VMEM);
    the bias slab stays f32 since it is added to the f32 accumulator.
    """
    (w1, b1, w2, b2, wc, bc, wf, bf) = params
    wh = jnp.concatenate([wf, wc], axis=1)             # [H, F+1]  == [Wf | Wc]
    bias = jnp.concatenate([b1, b2, bf, bc], axis=1)   # [1, 2H+F+1], f32
    return (w1.astype(jnp.bfloat16), w2.astype(jnp.bfloat16),
            wh.astype(jnp.bfloat16), bias)


def column_mlp_forward(x_batch, packed_params):
    """Batched forward: x_batch [B, C, inputSize] -> (outC [B, C], outF [B, F]).

    grid=(B,): x/outputs stream one sample per grid step; weight/bias
    BlockSpecs use constant index_maps so they stay VMEM-resident for the
    whole call.  The batch axis is "parallel" (v7x second TensorCore).
    """
    w1, w2, wh, bias = packed_params
    B, C, in_size = x_batch.shape
    F = wh.shape[1] - 1
    x_bf16 = x_batch.astype(jnp.bfloat16)

    def resident(arr):
        # Whole-array block, constant block index -> DMA'd once, stays in VMEM.
        return pl.BlockSpec(arr.shape, lambda b: (0,) * arr.ndim)

    outc, outf = pl.pallas_call(
        column_mlp_kernel,
        grid=(B,),
        in_specs=[
            pl.BlockSpec((1, C, in_size), lambda b: (b, 0, 0)),
            resident(w1), resident(w2), resident(wh), resident(bias),
        ],
        out_specs=[
            pl.BlockSpec((1, C, 1), lambda b: (b, 0, 0)),
            pl.BlockSpec((1, 1, F), lambda b: (b, 0, 0)),
        ],
        out_shape=[
            jax.ShapeDtypeStruct((B, C, 1), jnp.float32),
            jax.ShapeDtypeStruct((B, 1, F), jnp.float32),
        ],
        compiler_params=pltpu.CompilerParams(dimension_semantics=("parallel",)),
    )(x_bf16, w1, w2, wh, bias)
    # Match PyTorch per-sample return shapes: outC -> [C], outF -> [F].
    return outc[:, :, 0], outf[:, 0, :]


def init_params(key, input_size, hidden_size, f):
    """Deterministic PyTorch-style (uniform +/- 1/sqrt(fan_in)) init, f32."""
    def linear(key, fan_in, fan_out):
        kw, kb = jax.random.split(key)
        bound = 1.0 / jnp.sqrt(jnp.float32(fan_in))
        w = jax.random.uniform(kw, (fan_in, fan_out), jnp.float32, -bound, bound)
        b = jax.random.uniform(kb, (1, fan_out), jnp.float32, -bound, bound)
        return w, b

    k1, k2, k3, k4 = jax.random.split(key, 4)
    w1, b1 = linear(k1, input_size, hidden_size)   # Linear(inputSize, hiddenSize)
    w2, b2 = linear(k2, hidden_size, hidden_size)  # Linear(hiddenSize, hiddenSize)
    wc, bc = linear(k3, hidden_size, 1)            # linearOutC: Linear(hiddenSize, 1)
    wf, bf = linear(k4, hidden_size, f)            # linearOutF: Linear(hiddenSize, f)
    return (w1, b1, w2, b2, wc, bc, wf, bf)


def reference_forward(x, params):
    """Pure-f32 per-sample reference matching the PyTorch module exactly."""
    (w1, b1, w2, b2, wc, bc, wf, bf) = params
    h = jnp.maximum(x @ w1 + b1, 0.0)
    h = jnp.maximum(h @ w2 + b2, 0.0)
    scores = (h @ wc + bc)[:, 0]
    outc = jax.nn.softmax(scores, axis=0)
    in_f = jnp.sum(h * outc[:, None], axis=0)
    outf = in_f @ wf + bf[0]
    return outc, outf


if __name__ == "__main__":
    # Small, deterministic databaseNetworkObject-like dims.
    p, s, c, f = 2, 2, 4, 8
    input_size = p * s * f          # inferencePredictiveNetworkUseInputAllProperties=True -> 32
    hidden_size = input_size * 4    # hiddenSizeMultiplier=4 -> 128
    batch = 8                       # batch grid axis (raises MXU M utilization)

    key = jax.random.PRNGKey(0)
    kx, kp = jax.random.split(key)
    x = jax.random.normal(kx, (batch, c, input_size), jnp.float32)  # [B, C, inputSize]
    params = init_params(kp, input_size, hidden_size, f)
    packed_params = pack_params(params)

    outc, outf = column_mlp_forward(x, packed_params)
    jax.block_until_ready((outc, outf))

    assert outc.shape == (batch, c) and outf.shape == (batch, f)
    # Exact softmax division -> each row of outC sums to 1 up to f32 rounding.
    assert jnp.allclose(jnp.sum(outc, axis=1), 1.0, atol=1e-5)

    ref_c = jnp.stack([reference_forward(x[b], params)[0] for b in range(batch)])
    ref_f = jnp.stack([reference_forward(x[b], params)[1] for b in range(batch)])
    # bf16 matmul operands (f32 accumulation) vs. a pure-f32 reference:
    # tolerances chosen for bf16's ~0.4% operand rounding through 3 matmuls.
    assert jnp.allclose(outc, ref_c, atol=5e-2, rtol=5e-2)
    assert jnp.allclose(outf, ref_f, atol=5e-2, rtol=5e-2)
    print("KERNEL_OK")
</pallas_src>

<mosaic_0001>
module attributes {stable_mosaic.version = 11 : i64} {
  func.func @column_mlp_kernel(%arg0: i32, %arg1: memref<1x4x32xbf16, #tpu.memory_space<vmem>>, %arg2: memref<32x128xbf16, #tpu.memory_space<vmem>>, %arg3: memref<128x128xbf16, #tpu.memory_space<vmem>>, %arg4: memref<128x9xbf16, #tpu.memory_space<vmem>>, %arg5: memref<1x265xf32, #tpu.memory_space<vmem>>, %arg6: memref<1x4x1xf32, #tpu.memory_space<vmem>>, %arg7: memref<1x1x8xf32, #tpu.memory_space<vmem>>) attributes {dimension_semantics = [#tpu.dimension_semantics<parallel>], iteration_bounds = array<i64: 8>, scalar_prefetch = 0 : i64, scratch_operands = 0 : i64, tpu.core_type = #tpu.core_type<tc>, window_params = [{transform_indices = @transform_0, window_bounds = array<i64: 1, 4, 32>}, {pipeline_mode = #tpu.pipeline_mode<synchronous>, transform_indices = @transform_1, window_bounds = array<i64: 32, 128>}, {pipeline_mode = #tpu.pipeline_mode<synchronous>, transform_indices = @transform_2, window_bounds = array<i64: 128, 128>}, {pipeline_mode = #tpu.pipeline_mode<synchronous>, transform_indices = @transform_3, window_bounds = array<i64: 128, 9>}, {pipeline_mode = #tpu.pipeline_mode<synchronous>, transform_indices = @transform_4, window_bounds = array<i64: 1, 265>}, {transform_indices = @transform_5, window_bounds = array<i64: 1, 4, 1>}, {transform_indices = @transform_6, window_bounds = array<i64: 1, 1, 8>}]} {
    %c0 = arith.constant 0 : index
    %c0_0 = arith.constant 0 : index
    %0 = vector.load %arg5[%c0, %c0_0] : memref<1x265xf32, #tpu.memory_space<vmem>>, vector<1x128xf32>
    %c0_1 = arith.constant 0 : index
    %c128 = arith.constant 128 : index
    %1 = vector.load %arg5[%c0_1, %c128] : memref<1x265xf32, #tpu.memory_space<vmem>>, vector<1x128xf32>
    %c0_2 = arith.constant 0 : index
    %c256 = arith.constant 256 : index
    %2 = vector.load %arg5[%c0_2, %c256] : memref<1x265xf32, #tpu.memory_space<vmem>>, vector<1x9xf32>
    %c0_3 = arith.constant 0 : index
    %c0_4 = arith.constant 0 : index
    %c0_5 = arith.constant 0 : index
    %3 = vector.load %arg1[%c0_3, %c0_4, %c0_5] : memref<1x4x32xbf16, #tpu.memory_space<vmem>>, vector<1x4x32xbf16>
    %4 = vector.shape_cast %3 : vector<1x4x32xbf16> to vector<4x32xbf16>
    %c0_6 = arith.constant 0 : index
    %c0_7 = arith.constant 0 : index
    %5 = vector.load %arg2[%c0_6, %c0_7] : memref<32x128xbf16, #tpu.memory_space<vmem>>, vector<32x128xbf16>
    %cst = arith.constant dense<0.000000e+00> : vector<4x128xf32>
    %6 = tpu.matmul %4, %5, %cst {dimension_numbers = #tpu.dot_dimension_numbers<[1], [0], [0], [1], [0, 0, 1, 1], [], []>} : vector<4x32xbf16>, vector<32x128xbf16>, vector<4x128xf32> -> vector<4x128xf32>
    %7 = vector.broadcast %0 : vector<1x128xf32> to vector<4x128xf32>
    %8 = arith.addf %6, %7 : vector<4x128xf32>
    %cst_8 = arith.constant 0.000000e+00 : f32
    %9 = vector.broadcast %cst_8 : f32 to vector<4x128xf32>
    %10 = arith.maximumf %8, %9 : vector<4x128xf32>
    %11 = arith.truncf %10 : vector<4x128xf32> to vector<4x128xbf16>
    %c0_9 = arith.constant 0 : index
    %c0_10 = arith.constant 0 : index
    %12 = vector.load %arg3[%c0_9, %c0_10] : memref<128x128xbf16, #tpu.memory_space<vmem>>, vector<128x128xbf16>
    %cst_11 = arith.constant dense<0.000000e+00> : vector<4x128xf32>
    %13 = tpu.matmul %11, %12, %cst_11 {dimension_numbers = #tpu.dot_dimension_numbers<[1], [0], [0], [1], [0, 0, 1, 1], [], []>} : vector<4x128xbf16>, vector<128x128xbf16>, vector<4x128xf32> -> vector<4x128xf32>
    %14 = vector.broadcast %1 : vector<1x128xf32> to vector<4x128xf32>
    %15 = arith.addf %13, %14 : vector<4x128xf32>
    %cst_12 = arith.constant 0.000000e+00 : f32
    %16 = vector.broadcast %cst_12 : f32 to vector<4x128xf32>
    %17 = arith.maximumf %15, %16 : vector<4x128xf32>
    %18 = arith.truncf %17 : vector<4x128xf32> to vector<4x128xbf16>
    %c0_13 = arith.constant 0 : index
    %c0_14 = arith.constant 0 : index
    %19 = vector.load %arg4[%c0_13, %c0_14] : memref<128x9xbf16, #tpu.memory_space<vmem>>, vector<128x9xbf16>
    %cst_15 = arith.constant dense<0.000000e+00> : vector<4x9xf32>
    %20 = tpu.matmul %18, %19, %cst_15 {dimension_numbers = #tpu.dot_dimension_numbers<[1], [0], [0], [1], [0, 0, 1, 1], [], []>} : vector<4x128xbf16>, vector<128x9xbf16>, vector<4x9xf32> -> vector<4x9xf32>
    %21 = vector.broadcast %2 : vector<1x9xf32> to vector<4x9xf32>
    %22 = arith.addf %20, %21 : vector<4x9xf32>
    %23 = vector.extract_strided_slice %22 {offsets = [0, 0], sizes = [4, 8], strides = [1, 1]} : vector<4x9xf32> to vector<4x8xf32>
    %24 = vector.extract_strided_slice %22 {offsets = [0, 8], sizes = [4, 1], strides = [1, 1]} : vector<4x9xf32> to vector<4x1xf32>
    %cst_16 = arith.constant dense<0xFF800000> : vector<1xf32>
    %25 = vector.multi_reduction <maximumf>, %24, %cst_16 [0] : vector<4x1xf32> to vector<1xf32>
    %26 = vector.shape_cast %25 : vector<1xf32> to vector<1x1xf32>
    %27 = vector.broadcast %26 : vector<1x1xf32> to vector<4x1xf32>
    %28 = arith.subf %24, %27 : vector<4x1xf32>
    %29 = math.exp %28 : vector<4x1xf32>
    %cst_17 = arith.constant dense<0.000000e+00> : vector<1xf32>
    %30 = vector.multi_reduction <add>, %29, %cst_17 [0] : vector<4x1xf32> to vector<1xf32>
    %31 = vector.shape_cast %30 : vector<1xf32> to vector<1x1xf32>
    %32 = vector.broadcast %31 : vector<1x1xf32> to vector<4x1xf32>
    %33 = arith.divf %29, %32 : vector<4x1xf32>
    %34 = vector.broadcast %33 : vector<4x1xf32> to vector<4x8xf32>
    %35 = arith.mulf %34, %23 : vector<4x8xf32>
    %cst_18 = arith.constant dense<0.000000e+00> : vector<8xf32>
    %36 = vector.multi_reduction <add>, %35, %cst_18 [0] : vector<4x8xf32> to vector<8xf32>
    %37 = vector.shape_cast %36 : vector<8xf32> to vector<1x8xf32>
    %c0_19 = arith.constant 0 : index
    %c0_20 = arith.constant 0 : index
    %c0_21 = arith.constant 0 : index
    %38 = vector.load %arg6[%c0_19, %c0_20, %c0_21] : memref<1x4x1xf32, #tpu.memory_space<vmem>>, vector<1x4x1xf32>
    %39 = vector.shape_cast %38 : vector<1x4x1xf32> to vector<4x1xf32>
    %40 = vector.shape_cast %33 : vector<4x1xf32> to vector<1x4x1xf32>
    tpu.vector_store %arg6[%c0_19, %c0_20, %c0_21], %40 {strides = array<i32>} : memref<1x4x1xf32, #tpu.memory_space<vmem>>, vector<1x4x1xf32>,
    %c0_22 = arith.constant 0 : index
    %c0_23 = arith.constant 0 : index
    %c0_24 = arith.constant 0 : index
    %41 = vector.load %arg7[%c0_22, %c0_23, %c0_24] : memref<1x1x8xf32, #tpu.memory_space<vmem>>, vector<1x1x8xf32>
    %42 = vector.shape_cast %41 : vector<1x1x8xf32> to vector<1x8xf32>
    %43 = vector.shape_cast %37 : vector<1x8xf32> to vector<1x1x8xf32>
    tpu.vector_store %arg7[%c0_22, %c0_23, %c0_24], %43 {strides = array<i32>} : memref<1x1x8xf32, #tpu.memory_space<vmem>>, vector<1x1x8xf32>,
    return
  }
  func.func @transform_0(%arg0: i32) -> (i32, i32, i32) {
    %c0_i32 = arith.constant 0 : i32
    %c0_i32_0 = arith.constant 0 : i32
    %c0_i32_1 = arith.constant 0 : i32
    return %arg0, %c0_i32, %c0_i32_0 : i32, i32, i32
  }
  func.func @transform_1(%arg0: i32) -> (i32, i32) {
    %c0_i32 = arith.constant 0 : i32
    %c0_i32_0 = arith.constant 0 : i32
    %c0_i32_1 = arith.constant 0 : i32
    return %c0_i32, %c0_i32_0 : i32, i32
  }
  func.func @transform_2(%arg0: i32) -> (i32, i32) {
    %c0_i32 = arith.constant 0 : i32
    %c0_i32_0 = arith.constant 0 : i32
    %c0_i32_1 = arith.constant 0 : i32
    return %c0_i32, %c0_i32_0 : i32, i32
  }
  func.func @transform_3(%arg0: i32) -> (i32, i32) {
    %c0_i32 = arith.constant 0 : i32
    %c0_i32_0 = arith.constant 0 : i32
    %c0_i32_1 = arith.constant 0 : i32
    return %c0_i32, %c0_i32_0 : i32, i32
  }
  func.func @transform_4(%arg0: i32) -> (i32, i32) {
    %c0_i32 = arith.constant 0 : i32
    %c0_i32_0 = arith.constant 0 : i32
    %c0_i32_1 = arith.constant 0 : i32
    return %c0_i32, %c0_i32_0 : i32, i32
  }
  func.func @transform_5(%arg0: i32) -> (i32, i32, i32) {
    %c0_i32 = arith.constant 0 : i32
    %c0_i32_0 = arith.constant 0 : i32
    %c0_i32_1 = arith.constant 0 : i32
    return %arg0, %c0_i32, %c0_i32_0 : i32, i32, i32
  }
  func.func @transform_6(%arg0: i32) -> (i32, i32, i32) {
    %c0_i32 = arith.constant 0 : i32
    %c0_i32_0 = arith.constant 0 : i32
    %c0_i32_1 = arith.constant 0 : i32
    return %arg0, %c0_i32, %c0_i32_0 : i32, i32, i32
  }
}

</mosaic_0001>

<llo_original>
// kernel: tpu_custom_call.1
$region0: #{tpu_custom_call.1}
  #allocation0 [shape = 'u32[]', space=smem, size = 0x4, offset = 0x4, fixed_abs, tag = 'smem constant byte address 0x4 - core index']
  #allocation1 [shape = 'u32[72,128]{1,0:T(1,128)}', space=vmem, size = 0x9000, scoped, tag = 'internal scratch']
  %s0 = inlined_call_operand.hbm [shape: bf16[8,4,32], index: 0, kind: input, shape index: {}]
  %s1 = inlined_call_operand.hbm [shape: bf16[32,128], index: 1, kind: input, shape index: {}]
  %s2 = inlined_call_operand.vmem [shape: bf16[128,128], index: 2, kind: input, shape index: {}]
  %s3 = inlined_call_operand.vmem [shape: bf16[128,9], index: 3, kind: input, shape index: {}]
  %s4 = inlined_call_operand.vmem [shape: f32[1,265], index: 4, kind: input, shape index: {}]
  %s5 = inlined_call_operand.vmem [shape: f32[8,4,1], index: 5, kind: output, shape index: {0}]
  %s6 = inlined_call_operand.hbm [shape: f32[8,1,8], index: 6, kind: output, shape index: {1}]
  %7 = xla_tuple %s5, %s6
  %s8 = sld [smem:[#allocation0]]
  $region69: #{tpu_custom_call.1} parent=0
    _
  %s10 = ssub.s32 1, %s8
  %s11 = scalar_select 0, %s10, %s8
  $region1: #{tpu_custom_call.1} parent=0
    #allocation2 [shape = 'u8[2048]{0}', space=vmem, size = 0x800, scoped, tag = 'input window, operand 0']
    #allocation3 [shape = 's32[2]{0}', space=sflag, size = 0x8, scoped, tag = 'scoped memory for tpu_custom_call.1']
    #allocation4 [shape = 's32[2]{0}', space=sflag, size = 0x8, scoped, tag = 'scoped memory for tpu_custom_call.1']
    #allocation5 [shape = 'u8[8192]{0}', space=vmem, size = 0x2000, scoped, tag = 'input window, operand 1, single buffered']
    #allocation6 [shape = 's32[1]{0}', space=sflag, size = 0x4, scoped, tag = 'scoped memory for tpu_custom_call.1']
    #allocation7 [shape = 'u8[1024]{0}', space=vmem, size = 0x400, scoped, tag = 'output window, operand 1']
    %12 = vsyncpa [#allocation3], 0
    %s13 = scalar_lea.sflag [#allocation3], 1
    %14 = vsyncpa %s13, 0
    %15 = vsyncpa [#allocation6], 0
    %16 = vsyncpa [#allocation4], 0
    %s17 = scalar_lea.sflag [#allocation4], 1
    %18 = vsyncpa %s17, 0
    loop: start=0, step=1, limit=10
    $region2: #{tpu_custom_call.1} parent=1 // loop_pre_header
      _
    $region3: #{tpu_custom_call.1} parent=1 // loop_header
      %s20 = sphi 0, %s24
      %p21 = scmp.ge.s32.totalorder %s20, 10
      %s30 = sphi 0, %s32
      %s33 = sphi 0, %s30
      %s34 = sphi 0, %s33
      %s50 = sphi 0, %s34
      %s54 = sphi 0, %s54
      %s56 = sphi 0, %s54
      %s57 = sphi 0, %s56
      %s71 = sphi 0, %s57
      %s75 = sphi 0, %s75
      %s77 = sphi 0, %s75
      %s78 = sphi 0, %s77
      %s92 = sphi 0, %s78
      %s96 = sphi 0, %s96
      %s98 = sphi 0, %s96
      %s99 = sphi 0, %s98
      %s113 = sphi 0, %s99
      %s117 = sphi 0, %s117
      %s119 = sphi 0, %s117
      %s120 = sphi 0, %s119
      %s134 = sphi 0, %s120
      %s140 = sphi 0, %s142
      %s143 = sphi 0, %s140
      %s144 = sphi 0, %s143
      %s160 = sphi 0, %s144
      %s166 = sphi 0, %s168
      %s169 = sphi 0, %s166
      %s170 = sphi 0, %s169
      %s186 = sphi 0, %s170
    $region4: #{tpu_custom_call.1} parent=1 // loop_header_branch
      %23 = sbr.rel (%p21) target = $region8
    $region5: #{tpu_custom_call.1} parent=1 // loop_body
      %s25 = ssub.s32 %s20, 1
      %s26 = ssub.s32 %s20, 2
      %s27 = sadd.s32 %s20, 1
      %s28 = ssub.s32 %s20, %s27
      %p29 = scmp.eq.s32.totalorder %s28, 0
      %s31 = sadd.s32 %s30, 1
      %s32 = scalar_select %p29, %s30, %s31
      %p35 = pneg %p29
      %p36 = scmp.eq.s32.totalorder %s20, 7
      %p37 = por %p35, %p36
      %p38 = scmp.ne.s32.totalorder %s30, %s33
      %p39 = scmp.eq.s32.totalorder %s20, 0
      %p40 = por %p38, %p39
      %p41 = scmp.ne.s32.totalorder %s30, %s33
      %p42 = scmp.eq.s32.totalorder %s25, 7
      %p43 = por %p41, %p42
      %p44 = scmp.ne.s32.totalorder %s33, %s34
      %p45 = scmp.eq.s32.totalorder %s25, 0
      %p46 = por %p44, %p45
      %p47 = scmp.ne.s32.totalorder %s33, %s34
      %p48 = scmp.eq.s32.totalorder %s26, 7
      %p49 = por %p47, %p48
      %p51 = scmp.ne.s32.totalorder %s34, %s50
      %p52 = scmp.eq.s32.totalorder %s26, 0
      %p53 = por %p51, %p52
      %s55 = sadd.s32 %s54, 1
      %p58 = scmp.eq.s32.totalorder %s20, 7
      %p59 = scmp.ne.s32.totalorder %s54, %s56
      %p60 = scmp.eq.s32.totalorder %s20, 0
      %p61 = por %p59, %p60
      %p62 = scmp.ne.s32.totalorder %s54, %s56
      %p63 = scmp.eq.s32.totalorder %s25, 7
      %p64 = por %p62, %p63
      %p65 = scmp.ne.s32.totalorder %s56, %s57
      %p66 = scmp.eq.s32.totalorder %s25, 0
      %p67 = por %p65, %p66
      %p68 = scmp.ne.s32.totalorder %s56, %s57
      %p69 = scmp.eq.s32.totalorder %s26, 7
      %p70 = por %p68, %p69
      %p72 = scmp.ne.s32.totalorder %s57, %s71
      %p73 = scmp.eq.s32.totalorder %s26, 0
      %p74 = por %p72, %p73
      %s76 = sadd.s32 %s75, 1
      %p79 = scmp.eq.s32.totalorder %s20, 7
      %p80 = scmp.ne.s32.totalorder %s75, %s77
      %p81 = scmp.eq.s32.totalorder %s20, 0
      %p82 = por %p80, %p81
      %p83 = scmp.ne.s32.totalorder %s75, %s77
      %p84 = scmp.eq.s32.totalorder %s25, 7
      %p85 = por %p83, %p84
      %p86 = scmp.ne.s32.totalorder %s77, %s78
      %p87 = scmp.eq.s32.totalorder %s25, 0
      %p88 = por %p86, %p87
      %p89 = scmp.ne.s32.totalorder %s77, %s78
      %p90 = scmp.eq.s32.totalorder %s26, 7
      %p91 = por %p89, %p90
      %p93 = scmp.ne.s32.totalorder %s78, %s92
      %p94 = scmp.eq.s32.totalorder %s26, 0
      %p95 = por %p93, %p94
      %s97 = sadd.s32 %s96, 1
      %p100 = scmp.eq.s32.totalorder %s20, 7
      %p101 = scmp.ne.s32.totalorder %s96, %s98
      %p102 = scmp.eq.s32.totalorder %s20, 0
      %p103 = por %p101, %p102
      %p104 = scmp.ne.s32.totalorder %s96, %s98
      %p105 = scmp.eq.s32.totalorder %s25, 7
      %p106 = por %p104, %p105
      %p107 = scmp.ne.s32.totalorder %s98, %s99
      %p108 = scmp.eq.s32.totalorder %s25, 0
      %p109 = por %p107, %p108
      %p110 = scmp.ne.s32.totalorder %s98, %s99
      %p111 = scmp.eq.s32.totalorder %s26, 7
      %p112 = por %p110, %p111
      %p114 = scmp.ne.s32.totalorder %s99, %s113
      %p115 = scmp.eq.s32.totalorder %s26, 0
      %p116 = por %p114, %p115
      %s118 = sadd.s32 %s117, 1
      %p121 = scmp.eq.s32.totalorder %s20, 7
      %p122 = scmp.ne.s32.totalorder %s117, %s119
      %p123 = scmp.eq.s32.totalorder %s20, 0
      %p124 = por %p122, %p123
      %p125 = scmp.ne.s32.totalorder %s117, %s119
      %p126 = scmp.eq.s32.totalorder %s25, 7
      %p127 = por %p125, %p126
      %p128 = scmp.ne.s32.totalorder %s119, %s120
      %p129 = scmp.eq.s32.totalorder %s25, 0
      %p130 = por %p128, %p129
      %p131 = scmp.ne.s32.totalorder %s119, %s120
      %p132 = scmp.eq.s32.totalorder %s26, 7
      %p133 = por %p131, %p132
      %p135 = scmp.ne.s32.totalorder %s120, %s134
      %p136 = scmp.eq.s32.totalorder %s26, 0
      %p137 = por %p135, %p136
      %s138 = ssub.s32 %s20, %s27
      %p139 = scmp.eq.s32.totalorder %s138, 0
      %s141 = sadd.s32 %s140, 1
      %s142 = scalar_select %p139, %s140, %s141
      %p145 = pneg %p139
      %p146 = scmp.eq.s32.totalorder %s20, 7
      %p147 = por %p145, %p146
      %p148 = scmp.ne.s32.totalorder %s140, %s143
      %p149 = scmp.eq.s32.totalorder %s20, 0
      %p150 = por %p148, %p149
      %p151 = scmp.ne.s32.totalorder %s140, %s143
      %p152 = scmp.eq.s32.totalorder %s25, 7
      %p153 = por %p151, %p152
      %p154 = scmp.ne.s32.totalorder %s143, %s144
      %p155 = scmp.eq.s32.totalorder %s25, 0
      %p156 = por %p154, %p155
      %p157 = scmp.ne.s32.totalorder %s143, %s144
      %p158 = scmp.eq.s32.totalorder %s26, 7
      %p159 = por %p157, %p158
      %p161 = scmp.ne.s32.totalorder %s144, %s160
      %p162 = scmp.eq.s32.totalorder %s26, 0
      %p163 = por %p161, %p162
      %s164 = ssub.s32 %s20, %s27
      %p165 = scmp.eq.s32.totalorder %s164, 0
      %s167 = sadd.s32 %s166, 1
      %s168 = scalar_select %p165, %s166, %s167
      %p171 = pneg %p165
      %p172 = scmp.eq.s32.totalorder %s20, 7
      %p173 = por %p171, %p172
      %p174 = scmp.ne.s32.totalorder %s166, %s169
      %p175 = scmp.eq.s32.totalorder %s20, 0
      %p176 = por %p174, %p175
      %p177 = scmp.ne.s32.totalorder %s166, %s169
      %p178 = scmp.eq.s32.totalorder %s25, 7
      %p179 = por %p177, %p178
      %p180 = scmp.ne.s32.totalorder %s169, %s170
      %p181 = scmp.eq.s32.totalorder %s25, 0
      %p182 = por %p180, %p181
      %p183 = scmp.ne.s32.totalorder %s169, %s170
      %p184 = scmp.eq.s32.totalorder %s26, 7
      %p185 = por %p183, %p184
      %p187 = scmp.ne.s32.totalorder %s170, %s186
      %p188 = scmp.eq.s32.totalorder %s26, 0
      %p189 = por %p187, %p188
      %p190 = scmp.le.s32.totalorder 1, %s20
      %p191 = scmp.lt.s32.totalorder %s20, 9
      %p192 = pnand %p190, %p191
      %p193 = pneg %p192
      // Predicated region
      $region9: #{tpu_custom_call.1} parent=5 // pred_check
        _
      $region10: #{tpu_custom_call.1} parent=5 // pred_check_branch
        %195 = sbr.rel (%p192) target = $region12
      $region11: #{tpu_custom_call.1} parent=5 // pred_region
        %s196 = ssub.s32 %s20, 1
        // Predicated region
        $region13: #{tpu_custom_call.1} parent=11 // pred_check
          %p197 = pneg %p67
        $region14: #{tpu_custom_call.1} parent=11 // pred_check_branch
          %199 = sbr.rel (%p197) target = $region16
        $region15: #{tpu_custom_call.1} parent=11 // pred_region
          %201 = vsyncadd [#allocation6], 0
          %s202 = sshll.u32 %s1, 4
          %s203 = int_to_ptr.hbm [resolvable:$true] %s202
          %s204 = sshll.u32 [#allocation5], 4
          %s205 = int_to_ptr.vmem [resolvable:$true] %s204
          %210 = dma.hbm_to_vmem [thread:$0]  %s203, 256, %s205, [#allocation6], 64, 64, 4
        $region16: #{tpu_custom_call.1} parent=11 // pred_fallthru
          _
        // Predicated region
        $region17: #{tpu_custom_call.1} parent=11 // pred_check
          %p211 = pneg %p88
        $region18: #{tpu_custom_call.1} parent=11 // pred_check_branch
          %213 = sbr.rel (%p211) target = $region20
        $region19: #{tpu_custom_call.1} parent=11 // pred_region
          _
        $region20: #{tpu_custom_call.1} parent=11 // pred_fallthru
          _
        // Predicated region
        $region21: #{tpu_custom_call.1} parent=11 // pred_check
          %p214 = pneg %p109
        $region22: #{tpu_custom_call.1} parent=11 // pred_check_branch
          %216 = sbr.rel (%p214) target = $region24
        $region23: #{tpu_custom_call.1} parent=11 // pred_region
          _
        $region24: #{tpu_custom_call.1} parent=11 // pred_fallthru
          _
        // Predicated region
        $region25: #{tpu_custom_call.1} parent=11 // pred_check
          %p217 = pneg %p130
        $region26: #{tpu_custom_call.1} parent=11 // pred_check_branch
          %219 = sbr.rel (%p217) target = $region28
        $region27: #{tpu_custom_call.1} parent=11 // pred_region
          _
        $region28: #{tpu_custom_call.1} parent=11 // pred_fallthru
          _
      $region12: #{tpu_custom_call.1} parent=5 // pred_fallthru
        _
      %p220 = scmp.lt.s32.totalorder %s20, 8
      // Predicated region
      $region29: #{tpu_custom_call.1} parent=5 // pred_check
        %p221 = pneg %p220
      $region30: #{tpu_custom_call.1} parent=5 // pred_check_branch
        %223 = sbr.rel (%p221) target = $region32
      $region31: #{tpu_custom_call.1} parent=5 // pred_region
        // Predicated region
        $region33: #{tpu_custom_call.1} parent=31 // pred_check
          %p224 = pneg %p40
        $region34: #{tpu_custom_call.1} parent=31 // pred_check_branch
          %226 = sbr.rel (%p224) target = $region36
        $region35: #{tpu_custom_call.1} parent=31 // pred_region
          %s227 = sand.u32 %s30, 1
          %s228 = scalar_lea.sflag [#allocation3], %s227
          %s229 = sand.u32 %s30, 1
          %s230 = smul.addr %s229, 2
          %s231 = scalar_lea.vmem [#allocation2], %s230
          %233 = vsyncadd %s228, 0
          %s234 = smul.addr %s20, 2
          %s235 = scalar_lea.hbm %s0, %s234
          %s237 = sshll.u32 %s235, 4
          %s238 = int_to_ptr.hbm [resolvable:$true] %s237
          %s239 = sshll.u32 %s231, 4
          %s240 = int_to_ptr.vmem [resolvable:$true] %s239
          %242 = dma.hbm_to_vmem [thread:$0]  %s238, 32, %s240, %s228
        $region36: #{tpu_custom_call.1} parent=31 // pred_fallthru
          _
      $region32: #{tpu_custom_call.1} parent=5 // pred_fallthru
        _
      %p243 = scmp.le.s32.totalorder 1, %s20
      %p244 = scmp.lt.s32.totalorder %s20, 9
      %p245 = pnand %p243, %p244
      %p246 = pneg %p245
      // Predicated region
      $region37: #{tpu_custom_call.1} parent=5 // pred_check
        _
      $region38: #{tpu_custom_call.1} parent=5 // pred_check_branch
        %248 = sbr.rel (%p245) target = $region40
      $region39: #{tpu_custom_call.1} parent=5 // pred_region
        %s249 = ssub.s32 %s20, 1
        %s250 = sand.u32 %s33, 1
        %s251 = scalar_lea.sflag [#allocation3], %s250
        %s252 = sand.u32 %s33, 1
        %s253 = smul.addr %s252, 2
        %s254 = scalar_lea.vmem [#allocation2], %s253
        // Predicated region
        $region41: #{tpu_custom_call.1} parent=39 // pred_check
          %p255 = pneg %p46
        $region42: #{tpu_custom_call.1} parent=39 // pred_check_branch
          %257 = sbr.rel (%p255) target = $region44
        $region43: #{tpu_custom_call.1} parent=39 // pred_region
          %259 = dma.done %s251, 32
        $region44: #{tpu_custom_call.1} parent=39 // pred_fallthru
          _
        // Predicated region
        $region45: #{tpu_custom_call.1} parent=39 // pred_check
          %p260 = pneg %p67
        $region46: #{tpu_custom_call.1} parent=39 // pred_check_branch
          %262 = sbr.rel (%p260) target = $region48
        $region47: #{tpu_custom_call.1} parent=39 // pred_region
          %264 = dma.done [#allocation6], 256
        $region48: #{tpu_custom_call.1} parent=39 // pred_fallthru
          _
        %s265 = sand.u32 %s33, 1
        %s266 = scalar_lea.sflag [#allocation3], %s265
        %s267 = sand.u32 %s33, 1
        %s268 = smul.addr %s267, 2
        %s269 = scalar_lea.vmem [#allocation2], %s268
        %p270 = pneg %p46
        %p271 = pneg %p43
        %p272 = pneg %p67
        %p273 = pneg %p64
        %p274 = pneg %p88
        %p275 = pneg %p85
        %p276 = pneg %p109
        %p277 = pneg %p106
        %p278 = pneg %p130
        %p279 = pneg %p127
        %p280 = pneg %p156
        %p281 = pneg %p153
        %p282 = scmp.lt.s32.totalorder %s25, 7
        %s283 = scalar_select %p282, %s25, 7
        %s284 = smul.addr %s283, 4
        %s285 = scalar_lea.vmem %s5, %s284
        %p286 = pneg %p182
        %p287 = pneg %p179
        %s288 = sand.u32 %s169, 1
        %s289 = scalar_lea.sflag [#allocation4], %s288
        %s290 = sand.u32 %s169, 1
        %s291 = scalar_lea.vmem [#allocation7], %s290
        %p292 = scmp.lt.s32.totalorder %s25, 7
        %s293 = scalar_select %p292, %s25, 7
        %s294 = smul.addr %s293, 4
        %s295 = scalar_lea.vmem %s5, %s294
        %v297 = vld [vmem:[%s4] sm:$0x1]
        %v298 = vld [vmem:[%s4 + $0x1] sm:$0x1]
        %v299 = vld [vmem:[%s4 + $0x2] sm:$0x1]
        %v300 = vld [vmem:[%s254] sm:$0x3]
        %v301 = vld [vmem:[#allocation5] sm:$0xf]
        %v302 = vld [vmem:[#allocation5 + $0x4] sm:$0xf]
        %v303 = vld [vmem:[#allocation5 + $0x8] sm:$0xf]
        %v304 = vld [vmem:[#allocation5 + $0xc] sm:$0xf]
        %v306 = vperm.slane %v297, 0
        %v312 = vunpack.c.l.b16 %v301
        %v313 = vunpack.c.l.b16 %v302
        %v314 = vunpack.c.l.b16 %v303
        %v315 = vunpack.c.l.b16 %v304
        %v316 = vpack.c.b16 %v313, %v312
        %v317 = vpack.c.b16 %v315, %v314
        %vm320 = vcmask 261120
        %v322 = vsel %vm320, %v300, 0
        %324 = vmatpush.bf16.msra.mxu0 0
        %325 = vmatpush.bf16.msra.mxu0 0
        %326 = vmatpush.bf16.msra.mxu0 0
        %327 = vmatpush.bf16.msra.mxu0 0
        %328 = vmatpush.bf16.msra.mxu0 0
        %329 = vmatpush.bf16.msra.mxu0 0
        %330 = vmatpush.bf16.msra.mxu0 %v317
        %331 = vmatpush.bf16.msra.mxu0 %v316
        %332 = vmatmul.bf16.gmra.mxu0 %v322
        %v333 = vpop.f32.mrf.mxu0
        %v334 = vadd.f32 %v306, %v333
        %v335 = vpop.f32.mrf.mxu0
        %336 = vdwg.mxu0
        %v337 = vmax.f32 %v334, 0.0
        %v338 = vpack.c.bf16 %v337, %v337
        %v339 = vld [vmem:[%s2] sm:$0xf]
        %v340 = vld [vmem:[%s2 + $0x4] sm:$0xf]
        %v341 = vld [vmem:[%s2 + $0x8] sm:$0xf]
        %v342 = vld [vmem:[%s2 + $0xc] sm:$0xf]
        %v343 = vld [vmem:[%s2 + $0x10] sm:$0xf]
        %v344 = vld [vmem:[%s2 + $0x14] sm:$0xf]
        %v345 = vld [vmem:[%s2 + $0x18] sm:$0xf]
        %v346 = vld [vmem:[%s2 + $0x1c] sm:$0xf]
        %v347 = vld [vmem:[%s2 + $0x20] sm:$0xf]
        %v348 = vld [vmem:[%s2 + $0x24] sm:$0xf]
        %v349 = vld [vmem:[%s2 + $0x28] sm:$0xf]
        %v350 = vld [vmem:[%s2 + $0x2c] sm:$0xf]
        %v351 = vld [vmem:[%s2 + $0x30] sm:$0xf]
        %v352 = vld [vmem:[%s2 + $0x34] sm:$0xf]
        %v353 = vld [vmem:[%s2 + $0x38] sm:$0xf]
        %v354 = vld [vmem:[%s2 + $0x3c] sm:$0xf]
        %v356 = vperm.slane %v298, 0
        %v374 = vunpack.c.l.b16 %v339
        %v375 = vunpack.c.l.b16 %v340
        %v376 = vunpack.c.l.b16 %v341
        %v377 = vunpack.c.l.b16 %v342
        %v378 = vunpack.c.l.b16 %v343
        %v379 = vunpack.c.l.b16 %v344
        %v380 = vunpack.c.l.b16 %v345
        %v381 = vunpack.c.l.b16 %v346
        %v382 = vunpack.c.l.b16 %v347
        %v383 = vunpack.c.l.b16 %v348
        %v384 = vunpack.c.l.b16 %v349
        %v385 = vunpack.c.l.b16 %v350
        %v386 = vunpack.c.l.b16 %v351
        %v387 = vunpack.c.l.b16 %v352
        %v388 = vunpack.c.l.b16 %v353
        %v389 = vunpack.c.l.b16 %v354
        %v390 = vpack.c.b16 %v375, %v374
        %v391 = vpack.c.b16 %v377, %v376
        %v392 = vpack.c.b16 %v379, %v378
        %v393 = vpack.c.b16 %v381, %v380
        %v394 = vpack.c.b16 %v383, %v382
        %v395 = vpack.c.b16 %v385, %v384
        %v396 = vpack.c.b16 %v387, %v386
        %v397 = vpack.c.b16 %v389, %v388
        %406 = vmatpush.bf16.msra.mxu0 %v397
        %407 = vmatpush.bf16.msra.mxu0 %v396
        %408 = vmatpush.bf16.msra.mxu0 %v395
        %409 = vmatpush.bf16.msra.mxu0 %v394
        %410 = vmatpush.bf16.msra.mxu0 %v393
        %411 = vmatpush.bf16.msra.mxu0 %v392
        %412 = vmatpush.bf16.msra.mxu0 %v391
        %413 = vmatpush.bf16.msra.mxu0 %v390
        %414 = vmatmul.bf16.gmra.mxu0 %v338
        %v415 = vpop.f32.mrf.mxu0
        %v416 = vadd.f32 %v356, %v415
        %v417 = vpop.f32.mrf.mxu0
        %418 = vdwg.mxu0
        %v419 = vmax.f32 %v416, 0.0
        %v420 = vpack.c.bf16 %v419, %v419
        %v421 = vld [vmem:[%s3] sm:$0xf]
        %v422 = vld [vmem:[%s3 + $0x4] sm:$0xf]
        %v423 = vld [vmem:[%s3 + $0x8] sm:$0xf]
        %v424 = vld [vmem:[%s3 + $0xc] sm:$0xf]
        %v425 = vld [vmem:[%s3 + $0x10] sm:$0xf]
        %v426 = vld [vmem:[%s3 + $0x14] sm:$0xf]
        %v427 = vld [vmem:[%s3 + $0x18] sm:$0xf]
        %v428 = vld [vmem:[%s3 + $0x1c] sm:$0xf]
        %v429 = vld [vmem:[%s3 + $0x20] sm:$0xf]
        %v430 = vld [vmem:[%s3 + $0x24] sm:$0xf]
        %v431 = vld [vmem:[%s3 + $0x28] sm:$0xf]
        %v432 = vld [vmem:[%s3 + $0x2c] sm:$0xf]
        %v433 = vld [vmem:[%s3 + $0x30] sm:$0xf]
        %v434 = vld [vmem:[%s3 + $0x34] sm:$0xf]
        %v435 = vld [vmem:[%s3 + $0x38] sm:$0xf]
        %v436 = vld [vmem:[%s3 + $0x3c] sm:$0xf]
        %v438 = vperm.slane %v299, 0
        %v456 = vunpack.c.l.b16 %v421
        %v457 = vunpack.c.l.b16 %v422
        %v458 = vunpack.c.l.b16 %v423
        %v459 = vunpack.c.l.b16 %v424
        %v460 = vunpack.c.l.b16 %v425
        %v461 = vunpack.c.l.b16 %v426
        %v462 = vunpack.c.l.b16 %v427
        %v463 = vunpack.c.l.b16 %v428
        %v464 = vunpack.c.l.b16 %v429
        %v465 = vunpack.c.l.b16 %v430
        %v466 = vunpack.c.l.b16 %v431
        %v467 = vunpack.c.l.b16 %v432
        %v468 = vunpack.c.l.b16 %v433
        %v469 = vunpack.c.l.b16 %v434
        %v470 = vunpack.c.l.b16 %v435
        %v471 = vunpack.c.l.b16 %v436
        %v472 = vpack.c.b16 %v457, %v456
        %v473 = vpack.c.b16 %v459, %v458
        %v474 = vpack.c.b16 %v461, %v460
        %v475 = vpack.c.b16 %v463, %v462
        %v476 = vpack.c.b16 %v465, %v464
        %v477 = vpack.c.b16 %v467, %v466
        %v478 = vpack.c.b16 %v469, %v468
        %v479 = vpack.c.b16 %v471, %v470
        %488 = vmatpush.bf16.msra.mxu0 %v479
        %489 = vmatpush.bf16.msra.mxu0 %v478
        %490 = vmatpush.bf16.msra.mxu0 %v477
        %491 = vmatpush.bf16.msra.mxu0 %v476
        %492 = vmatpush.bf16.msra.mxu0 %v475
        %493 = vmatpush.bf16.msra.mxu0 %v474
        %494 = vmatpush.bf16.msra.mxu0 %v473
        %495 = vmatpush.bf16.msra.mxu0 %v472
        %496 = vmatmul.bf16.gmra.mxu0 %v420
        %v497 = vpop.f32.mrf.mxu0
        %v498 = vadd.f32 %v438, %v497
        %v499 = vpop.f32.mrf.mxu0
        %500 = vdwg.mxu0
        %vm501 = vcmask 68672
        %v502 = vsel %vm501, %v498, -inf
        %v503 = vrot.slane %v502, 4
        %v504 = vmax.f32 %v502, %v503
        %v505 = vrot.slane %v504, 2
        %v506 = vmax.f32 %v504, %v505
        %v507 = vrot.slane %v506, 1
        %v508 = vmax.f32 %v506, %v507
        %v509 = vsub.f32 %v498, %v508
        %v510 = vmul.f32 %v509, 1.442695
        %v511 = vpow.pop %v510
        %v512 = vsel %vm501, %v511, 0.0
        %v513 = vrot.slane %v512, 4
        %v514 = vadd.f32 %v512, %v513
        %v515 = vrot.slane %v514, 2
        %v516 = vadd.f32 %v514, %v515
        %v517 = vrot.slane %v516, 1
        %v518 = vadd.f32 %v516, %v517
        %v519 = vrcp.pop %v518
        %v520 = vmul.f32 %v518, %v519
        %v521 = vsub.f32 1.0, %v520
        %v522 = vmul.f32 %v519, %v521
        %v523 = vadd.f32 %v519, %v522
        %vm524 = vweird.f32 %v518
        %vm525 = vweird.f32 %v519
        %vm526 = vmor %vm524, %vm525
        %v527 = vsel %vm526, %v519, %v523
        %v528 = vand.u32 2147483647, %v518
        %vm529 = vcmp.eq.f32.partialorder %v528, 8.507059e+37
        %v530 = vand.u32 %v518, 2147483648
        %v531 = vor.u32 1.1754944e-38, %v530
        %v532 = vsel %vm529, %v531, %v527
        %v533 = vmul.f32 %v511, %v532
        %535 = vset.pattern.permute.xlu0 8
        %536 = vperm.xlu0 %535, %v533
        %v537 = vpop.permute.xlu0 %536
        %v539 = vmul.f32 %v537, %v498
        %vm540 = vcmask 60416
        %v541 = vsel %vm540, %v539, 0.0
        %v542 = vrot.slane %v541, 4
        %v543 = vadd.f32 %v541, %v542
        %v544 = vrot.slane %v543, 2
        %v545 = vadd.f32 %v543, %v544
        %v546 = vrot.slane %v545, 1
        %v547 = vadd.f32 %v545, %v546
        %548 = vrot.lane.b32.xlu0 %v533, 120
        %v549 = vpop.permute.xlu0 %548
        %vm551 = vcmask 3072
        %552 = vst.msk [vmem:[%s295] sm:$0xf] %vm551, %v549
        %vm553 = vcmask 57344
        %554 = vst.msk [vmem:[%s291] sm:$0x1] %vm553, %v547
        %p555 = scmp.lt.s32.totalorder %s25, 7
        %s556 = scalar_select %p555, %s25, 7
        %s557 = smul.addr %s556, 4
        %s558 = scalar_lea.vmem %s5, %s557
        %s559 = sand.u32 %s169, 1
        %s560 = scalar_lea.sflag [#allocation4], %s559
        %s561 = sand.u32 %s169, 1
        %s562 = scalar_lea.vmem [#allocation7], %s561
        // Predicated region
        $region49: #{tpu_custom_call.1} parent=39 // pred_check
          %p563 = pneg %p153
        $region50: #{tpu_custom_call.1} parent=39 // pred_check_branch
          %565 = sbr.rel (%p563) target = $region52
        $region51: #{tpu_custom_call.1} parent=39 // pred_region
          _
        $region52: #{tpu_custom_call.1} parent=39 // pred_fallthru
          _
        // Predicated region
        $region53: #{tpu_custom_call.1} parent=39 // pred_check
          %p566 = pneg %p179
        $region54: #{tpu_custom_call.1} parent=39 // pred_check_branch
          %568 = sbr.rel (%p566) target = $region56
        $region55: #{tpu_custom_call.1} parent=39 // pred_region
          %570 = vsyncadd %s560, 0
          %s571 = scalar_lea.hbm %s6, %s25
          %s573 = sshll.u32 %s562, 4
          %s574 = int_to_ptr.vmem [resolvable:$true] %s573
          %s575 = sshll.u32 %s571, 4
          %s576 = int_to_ptr.hbm [resolvable:$true] %s575
          %578 = dma.vmem_to_hbm [thread:$0]  %s574, 16, %s576, %s560
        $region56: #{tpu_custom_call.1} parent=39 // pred_fallthru
          _
      $region40: #{tpu_custom_call.1} parent=5 // pred_fallthru
        _
      %p579 = scmp.le.s32.totalorder 2, %s20
      // Predicated region
      $region57: #{tpu_custom_call.1} parent=5 // pred_check
        %p580 = pneg %p579
      $region58: #{tpu_custom_call.1} parent=5 // pred_check_branch
        %582 = sbr.rel (%p580) target = $region60
      $region59: #{tpu_custom_call.1} parent=5 // pred_region
        %s583 = ssub.s32 %s20, 2
        // Predicated region
        $region61: #{tpu_custom_call.1} parent=59 // pred_check
          %p584 = pneg %p159
        $region62: #{tpu_custom_call.1} parent=59 // pred_check_branch
          %586 = sbr.rel (%p584) target = $region64
        $region63: #{tpu_custom_call.1} parent=59 // pred_region
          %p587 = scmp.lt.s32.totalorder %s26, 7
          %s588 = scalar_select %p587, %s26, 7
          %s589 = smul.addr %s588, 4
          %s590 = scalar_lea.vmem %s5, %s589
        $region64: #{tpu_custom_call.1} parent=59 // pred_fallthru
          _
        // Predicated region
        $region65: #{tpu_custom_call.1} parent=59 // pred_check
          %p591 = pneg %p185
        $region66: #{tpu_custom_call.1} parent=59 // pred_check_branch
          %593 = sbr.rel (%p591) target = $region68
        $region67: #{tpu_custom_call.1} parent=59 // pred_region
          %s594 = sand.u32 %s170, 1
          %s595 = scalar_lea.sflag [#allocation4], %s594
          %s596 = sand.u32 %s170, 1
          %s597 = scalar_lea.vmem [#allocation7], %s596
          %599 = dma.done %s595, 16
        $region68: #{tpu_custom_call.1} parent=59 // pred_fallthru
          _
      $region60: #{tpu_custom_call.1} parent=5 // pred_fallthru
        _
    $region6: #{tpu_custom_call.1} parent=1 // loop_footer
      %s24 = sadd.s32 1, %s20
    $region7: #{tpu_custom_call.1} parent=1 // loop_footer_branch
      %19 = sbr.rel target = $region3
    $region8: #{tpu_custom_call.1} parent=1 // loop_exit
      _
    %600 = vsyncpa [#allocation3], 1
    %s601 = scalar_lea.sflag [#allocation3], 1
    %602 = vsyncpa %s601, 1
    %603 = vsyncpa [#allocation6], 1
    %604 = vsyncpa [#allocation4], 1
    %s605 = scalar_lea.sflag [#allocation4], 1
    %606 = vsyncpa %s605, 1

</llo_original>
